<compile_context>
chip_gen: v7x
topology: tpu7x:2x2x1
jax: 0.10.0
libtpu: 0.0.40
codegen_flags: <defaults>
</compile_context>

<pallas_src>
import functools

import jax
import jax.numpy as jnp
from jax.experimental import pallas as pl
from jax.experimental.pallas import tpu as pltpu

EPS = 1e-5
_VMEM_LIMIT = 32 * 1024 * 1024          # explicit scoped-VMEM limit (safe on v5e/v6e/v7x)
_FUSED_BYTES_BUDGET = 16 * 1024 * 1024  # gate for the single-call fused path


def _round_up(v, d):
    return (v + d - 1) // d * d


# ----------------------------------------------------------------------------
# Fused single-call kernel (small/medium problems: everything resident in VMEM)
# ----------------------------------------------------------------------------
def _fused_conv_bn_relu_kernel(p_ref, w_ref, gamma_ref, beta_ref, o_ref, *, m_valid):
    """Conv matmul + training-mode BN (stable centered variance) + ReLU.

    p_ref:     (m_pad, K)    bf16   im2col patches (rows >= m_valid are zero)
    w_ref:     (K, C_out)    bf16
    gamma_ref: (1, C_out)    f32
    beta_ref:  (1, C_out)    f32
    o_ref:     (m_pad, C_out) f32
    """
    y = jnp.dot(p_ref[...], w_ref[...], preferred_element_type=jnp.float32)

    inv_m = 1.0 / m_valid
    # Padded rows of p are zero -> contribute 0 to the sum; only the divisor
    # needs the true row count.
    mean = jnp.sum(y, axis=0, keepdims=True) * inv_m                 # (1, C)

    # Centered (cancellation-free) variance; mask padded rows out of the sum.
    row_ids = jax.lax.broadcasted_iota(jnp.int32, y.shape, 0)
    d = jnp.where(row_ids < m_valid, y - mean, 0.0)
    var = jnp.sum(d * d, axis=0, keepdims=True) * inv_m              # (1, C)

    scale = gamma_ref[...] * jax.lax.rsqrt(var + EPS)                # EUP rsqrt
    shift = beta_ref[...] - mean * scale
    o_ref[...] = jnp.maximum(y * scale + shift, 0.0).astype(o_ref.dtype)


# ----------------------------------------------------------------------------
# Tiled two-pass fallback (large problems that do not fit VMEM)
# ----------------------------------------------------------------------------
def _tiled_conv_stats_kernel(p_ref, w_ref, y_ref, stats_ref):
    """Pass 1: conv matmul tile -> bf16 y tile + per-tile per-channel stats."""
    y = jnp.dot(p_ref[...], w_ref[...], preferred_element_type=jnp.float32)
    y_ref[...] = y.astype(y_ref.dtype)
    s1 = jnp.sum(y, axis=0, keepdims=True)          # (1, C) sum
    s2 = jnp.sum(y * y, axis=0, keepdims=True)      # (1, C) sum of squares
    pad = jnp.zeros((6, y.shape[-1]), jnp.float32)  # sublane-pad 2 -> 8
    stats_ref[...] = jnp.concatenate([s1, s2, pad], axis=0)[None]


def _tiled_bn_relu_kernel(y_ref, scale_ref, shift_ref, o_ref):
    """Pass 2: pure VPU/memory epilogue (no recomputed matmul)."""
    y = y_ref[...].astype(jnp.float32)
    o_ref[...] = jnp.maximum(y * scale_ref[...] + shift_ref[...], 0.0).astype(
        o_ref.dtype)


# ----------------------------------------------------------------------------
# Wrapper
# ----------------------------------------------------------------------------
def _im2col(x, kh, kw):
    """x: (N, C, H, W) -> (N*OH*OW, C*KH*KW) bf16, feature order (c, i, j) to
    match torch's (out_ch, in_ch, kh, kw) weight layout.  stride=1 / VALID only."""
    n, c, h, w = x.shape
    oh, ow = h - kh + 1, w - kw + 1
    cols = []
    for ci in range(c):
        for i in range(kh):
            for j in range(kw):
                cols.append(x[:, ci, i:i + oh, j:j + ow])    # (N, OH, OW)
    patches = jnp.stack(cols, axis=-1)                        # (N, OH, OW, K)
    return patches.reshape(n * oh * ow, c * kh * kw).astype(jnp.bfloat16), oh, ow


@functools.partial(jax.jit, static_argnames=("kernel_size", "tm"))
def conv2d_bn_relu(x, weight, bias, gamma, beta, *, kernel_size, tm=512):
    del bias  # cancels exactly under training-mode BatchNorm
    n, c_in, h, w = x.shape
    c_out = weight.shape[0]
    kh = kw = kernel_size

    patches, oh, ow = _im2col(x, kh, kw)             # (M, K) bf16
    m, k = patches.shape

    # MXU weight operand (K, C_out) bf16 — no lane padding in HBM.
    w_mat = weight.reshape(c_out, k).T.astype(jnp.bfloat16)
    gamma2d = gamma.reshape(1, c_out).astype(jnp.float32)
    beta2d = beta.reshape(1, c_out).astype(jnp.float32)

    # ------------------------------------------------------------------ fused
    m_pad8 = _round_up(m, 8)
    fused_bytes = (m_pad8 * k * 2            # P
                   + k * c_out * 2           # W
                   + 3 * m_pad8 * c_out * 4)  # y live values + output (f32)
    if fused_bytes <= _FUSED_BYTES_BUDGET:
        p = patches
        if m_pad8 != m:
            p = jnp.concatenate(
                [p, jnp.zeros((m_pad8 - m, k), p.dtype)], axis=0)

        out = pl.pallas_call(
            functools.partial(_fused_conv_bn_relu_kernel, m_valid=m),
            out_shape=jax.ShapeDtypeStruct((m_pad8, c_out), jnp.float32),
            grid=(1,),
            in_specs=[
                pl.BlockSpec((m_pad8, k), lambda i: (0, 0)),
                pl.BlockSpec((k, c_out), lambda i: (0, 0)),
                pl.BlockSpec((1, c_out), lambda i: (0, 0)),
                pl.BlockSpec((1, c_out), lambda i: (0, 0)),
            ],
            out_specs=pl.BlockSpec((m_pad8, c_out), lambda i: (0, 0)),
            compiler_params=pltpu.CompilerParams(
                dimension_semantics=("arbitrary",),
                vmem_limit_bytes=_VMEM_LIMIT),
        )(p, w_mat, gamma2d, beta2d)

    # ------------------------------------------------------------------ tiled
    else:
        # NOTE(v7x): keep num_tiles an even number >= 2 so the "parallel" M
        # axis splits across both TensorCores; budget tiles against 64 MiB.
        m_pad = _round_up(m, tm)
        num_tiles = m_pad // tm
        p = patches
        if m_pad != m:
            p = jnp.concatenate(
                [p, jnp.zeros((m_pad - m, k), p.dtype)], axis=0)

        cparams = pltpu.CompilerParams(
            dimension_semantics=("parallel",),
            vmem_limit_bytes=_VMEM_LIMIT)

        # pass 1: conv matmul -> bf16 y + per-tile stats
        y_bf16, stats = pl.pallas_call(
            _tiled_conv_stats_kernel,
            out_shape=(jax.ShapeDtypeStruct((m_pad, c_out), jnp.bfloat16),
                       jax.ShapeDtypeStruct((num_tiles, 8, c_out), jnp.float32)),
            grid=(num_tiles,),
            in_specs=[
                pl.BlockSpec((tm, k), lambda i: (i, 0)),
                pl.BlockSpec((k, c_out), lambda i: (0, 0)),
            ],
            out_specs=(
                pl.BlockSpec((tm, c_out), lambda i: (i, 0)),
                pl.BlockSpec((1, 8, c_out), lambda i: (i, 0, 0)),
            ),
            compiler_params=cparams,
        )(p, w_mat)

        # tiny host-side finalize: (num_tiles, 8, C) -> scale / shift
        s = jnp.sum(stats, axis=0)                        # (8, C)
        mean = s[0] / m
        var = jnp.maximum(s[1] / m - mean * mean, 0.0)    # biased variance
        scale = (gamma.astype(jnp.float32) * jax.lax.rsqrt(var + EPS))
        shift = beta.astype(jnp.float32) - mean * scale
        scale = scale.reshape(1, c_out)
        shift = shift.reshape(1, c_out)

        # pass 2: BN + ReLU epilogue over y (no recomputed matmul)
        out = pl.pallas_call(
            _tiled_bn_relu_kernel,
            out_shape=jax.ShapeDtypeStruct((m_pad, c_out), jnp.float32),
            grid=(num_tiles,),
            in_specs=[
                pl.BlockSpec((tm, c_out), lambda i: (i, 0)),
                pl.BlockSpec((1, c_out), lambda i: (0, 0)),
                pl.BlockSpec((1, c_out), lambda i: (0, 0)),
            ],
            out_specs=pl.BlockSpec((tm, c_out), lambda i: (i, 0)),
            compiler_params=cparams,
        )(y_bf16, scale, shift)

    # (M, C_out) -> NCHW (module contract).
    return out[:m].reshape(n, oh, ow, c_out).transpose(0, 3, 1, 2)


# ----------------------------------------------------------------------------
# Pure-JAX reference (module semantics)
# ----------------------------------------------------------------------------
def _reference(x, weight, bias, gamma, beta, *, matmul_dtype=jnp.float32):
    y = jax.lax.conv_general_dilated(
        x.astype(matmul_dtype), weight.astype(matmul_dtype),
        window_strides=(1, 1), padding="VALID",
        dimension_numbers=("NCHW", "OIHW", "NCHW"),
        preferred_element_type=jnp.float32)
    y = y + bias.reshape(1, -1, 1, 1)
    mean = jnp.mean(y, axis=(0, 2, 3), keepdims=True)
    var = jnp.mean((y - mean) ** 2, axis=(0, 2, 3), keepdims=True)
    y = (y - mean) * jax.lax.rsqrt(var + EPS)
    y = y * gamma.reshape(1, -1, 1, 1) + beta.reshape(1, -1, 1, 1)
    return jnp.maximum(y, 0.0)


if __name__ == "__main__":
    # Module config: Conv2D(sigma=nn.ReLU, in_ch=4, out_ch=8, kernel_size=3)
    N, C_IN, H, W = 2, 4, 16, 16
    C_OUT, KSIZE = 8, 3

    key = jax.random.PRNGKey(0)
    kx, kw_, kb = jax.random.split(key, 3)
    x = jax.random.normal(kx, (N, C_IN, H, W), dtype=jnp.float32)

    # Deterministic parameter init (kaiming-uniform-like bounds, fresh BN params).
    fan_in = C_IN * KSIZE * KSIZE
    bound = 1.0 / jnp.sqrt(fan_in)
    weight = jax.random.uniform(kw_, (C_OUT, C_IN, KSIZE, KSIZE),
                                minval=-bound, maxval=bound, dtype=jnp.float32)
    bias = jax.random.uniform(kb, (C_OUT,), minval=-bound, maxval=bound,
                              dtype=jnp.float32)
    gamma = jnp.ones((C_OUT,), jnp.float32)   # BatchNorm2d default weight
    beta = jnp.zeros((C_OUT,), jnp.float32)   # BatchNorm2d default bias

    out = conv2d_bn_relu(x, weight, bias, gamma, beta, kernel_size=KSIZE)
    out = jax.block_until_ready(out)

    assert out.shape == (N, C_OUT, H - KSIZE + 1, W - KSIZE + 1)

    # Apples-to-apples check: reference conv also fed bf16 (f32 accumulation).
    ref_bf16 = _reference(x, weight, bias, gamma, beta,
                          matmul_dtype=jnp.bfloat16)
    assert jnp.allclose(out, ref_bf16, atol=1e-3, rtol=1e-3), float(
        jnp.max(jnp.abs(out - ref_bf16)))

    # Loose check against the pure-f32 module semantics (bf16 MXU-feed tol).
    ref_f32 = _reference(x, weight, bias, gamma, beta,
                         matmul_dtype=jnp.float32)
    assert jnp.allclose(out, ref_f32, atol=5e-2, rtol=5e-2), float(
        jnp.max(jnp.abs(out - ref_f32)))

    print("KERNEL_OK")
</pallas_src>

<mosaic_0001>
module attributes {stable_mosaic.version = 11 : i64} {
  func.func @_fused_conv_bn_relu_kernel(%arg0: i32, %arg1: memref<392x36xbf16, #tpu.memory_space<vmem>>, %arg2: memref<36x8xbf16, #tpu.memory_space<vmem>>, %arg3: memref<1x8xf32, #tpu.memory_space<vmem>>, %arg4: memref<1x8xf32, #tpu.memory_space<vmem>>, %arg5: memref<392x8xf32, #tpu.memory_space<vmem>>) attributes {dimension_semantics = [#tpu.dimension_semantics<arbitrary>], iteration_bounds = array<i64: 1>, scalar_prefetch = 0 : i64, scratch_operands = 0 : i64, tpu.core_type = #tpu.core_type<tc>, window_params = [{pipeline_mode = #tpu.pipeline_mode<synchronous>, transform_indices = @transform_0, window_bounds = array<i64: 392, 36>}, {pipeline_mode = #tpu.pipeline_mode<synchronous>, transform_indices = @transform_1, window_bounds = array<i64: 36, 8>}, {pipeline_mode = #tpu.pipeline_mode<synchronous>, transform_indices = @transform_2, window_bounds = array<i64: 1, 8>}, {pipeline_mode = #tpu.pipeline_mode<synchronous>, transform_indices = @transform_3, window_bounds = array<i64: 1, 8>}, {pipeline_mode = #tpu.pipeline_mode<synchronous>, transform_indices = @transform_4, window_bounds = array<i64: 392, 8>}]} {
    %c0 = arith.constant 0 : index
    %c0_0 = arith.constant 0 : index
    %0 = vector.load %arg1[%c0, %c0_0] : memref<392x36xbf16, #tpu.memory_space<vmem>>, vector<392x36xbf16>
    %c0_1 = arith.constant 0 : index
    %c0_2 = arith.constant 0 : index
    %1 = vector.load %arg2[%c0_1, %c0_2] : memref<36x8xbf16, #tpu.memory_space<vmem>>, vector<36x8xbf16>
    %cst = arith.constant dense<0.000000e+00> : vector<392x8xf32>
    %2 = tpu.matmul %0, %1, %cst {dimension_numbers = #tpu.dot_dimension_numbers<[1], [0], [0], [1], [0, 0, 1, 1], [], []>} : vector<392x36xbf16>, vector<36x8xbf16>, vector<392x8xf32> -> vector<392x8xf32>
    %cst_3 = arith.constant dense<0.000000e+00> : vector<8xf32>
    %3 = vector.multi_reduction <add>, %2, %cst_3 [0] : vector<392x8xf32> to vector<8xf32>
    %4 = vector.shape_cast %3 : vector<8xf32> to vector<1x8xf32>
    %cst_4 = arith.constant 0.00255102036 : f32
    %5 = vector.broadcast %cst_4 : f32 to vector<1x8xf32>
    %6 = arith.mulf %4, %5 : vector<1x8xf32>
    %7 = tpu.iota {dimensions = array<i32: 0>} : vector<392x8xi32>
    %c392_i32 = arith.constant 392 : i32
    %8 = vector.broadcast %c392_i32 : i32 to vector<392x8xi32>
    %9 = arith.cmpi slt, %7, %8 : vector<392x8xi32>
    %10 = vector.broadcast %6 : vector<1x8xf32> to vector<392x8xf32>
    %11 = arith.subf %2, %10 : vector<392x8xf32>
    %cst_5 = arith.constant 0.000000e+00 : f32
    %12 = vector.broadcast %cst_5 : f32 to vector<392x8xf32>
    %13 = arith.select %9, %11, %12 : vector<392x8xi1>, vector<392x8xf32>
    %14 = arith.mulf %13, %13 : vector<392x8xf32>
    %cst_6 = arith.constant dense<0.000000e+00> : vector<8xf32>
    %15 = vector.multi_reduction <add>, %14, %cst_6 [0] : vector<392x8xf32> to vector<8xf32>
    %16 = vector.shape_cast %15 : vector<8xf32> to vector<1x8xf32>
    %cst_7 = arith.constant 0.00255102036 : f32
    %17 = vector.broadcast %cst_7 : f32 to vector<1x8xf32>
    %18 = arith.mulf %16, %17 : vector<1x8xf32>
    %c0_8 = arith.constant 0 : index
    %c0_9 = arith.constant 0 : index
    %19 = vector.load %arg3[%c0_8, %c0_9] : memref<1x8xf32, #tpu.memory_space<vmem>>, vector<1x8xf32>
    %cst_10 = arith.constant 9.99999974E-6 : f32
    %20 = vector.broadcast %cst_10 : f32 to vector<1x8xf32>
    %21 = arith.addf %18, %20 : vector<1x8xf32>
    %22 = math.rsqrt %21 : vector<1x8xf32>
    %23 = arith.mulf %19, %22 : vector<1x8xf32>
    %c0_11 = arith.constant 0 : index
    %c0_12 = arith.constant 0 : index
    %24 = vector.load %arg4[%c0_11, %c0_12] : memref<1x8xf32, #tpu.memory_space<vmem>>, vector<1x8xf32>
    %25 = arith.mulf %6, %23 : vector<1x8xf32>
    %26 = arith.subf %24, %25 : vector<1x8xf32>
    %27 = vector.broadcast %23 : vector<1x8xf32> to vector<392x8xf32>
    %28 = arith.mulf %2, %27 : vector<392x8xf32>
    %29 = vector.broadcast %26 : vector<1x8xf32> to vector<392x8xf32>
    %30 = arith.addf %28, %29 : vector<392x8xf32>
    %cst_13 = arith.constant 0.000000e+00 : f32
    %31 = vector.broadcast %cst_13 : f32 to vector<392x8xf32>
    %32 = arith.maximumf %30, %31 : vector<392x8xf32>
    %c0_14 = arith.constant 0 : index
    %c0_15 = arith.constant 0 : index
    %33 = vector.load %arg5[%c0_14, %c0_15] : memref<392x8xf32, #tpu.memory_space<vmem>>, vector<392x8xf32>
    tpu.vector_store %arg5[%c0_14, %c0_15], %32 {strides = array<i32>} : memref<392x8xf32, #tpu.memory_space<vmem>>, vector<392x8xf32>,
    return
  }
  func.func @transform_0(%arg0: i32) -> (i32, i32) {
    %c0_i32 = arith.constant 0 : i32
    %c0_i32_0 = arith.constant 0 : i32
    %c0_i32_1 = arith.constant 0 : i32
    return %c0_i32, %c0_i32_0 : i32, i32
  }
  func.func @transform_1(%arg0: i32) -> (i32, i32) {
    %c0_i32 = arith.constant 0 : i32
    %c0_i32_0 = arith.constant 0 : i32
    %c0_i32_1 = arith.constant 0 : i32
    return %c0_i32, %c0_i32_0 : i32, i32
  }
  func.func @transform_2(%arg0: i32) -> (i32, i32) {
    %c0_i32 = arith.constant 0 : i32
    %c0_i32_0 = arith.constant 0 : i32
    %c0_i32_1 = arith.constant 0 : i32
    return %c0_i32, %c0_i32_0 : i32, i32
  }
  func.func @transform_3(%arg0: i32) -> (i32, i32) {
    %c0_i32 = arith.constant 0 : i32
    %c0_i32_0 = arith.constant 0 : i32
    %c0_i32_1 = arith.constant 0 : i32
    return %c0_i32, %c0_i32_0 : i32, i32
  }
  func.func @transform_4(%arg0: i32) -> (i32, i32) {
    %c0_i32 = arith.constant 0 : i32
    %c0_i32_0 = arith.constant 0 : i32
    %c0_i32_1 = arith.constant 0 : i32
    return %c0_i32, %c0_i32_0 : i32, i32
  }
}

</mosaic_0001>

<llo_original>
// kernel: conv2d_bn_relu.1
$region0: #{conv2d_bn_relu.1}
  #allocation0 [shape = 'u32[]', space=smem, size = 0x4, offset = 0x4, fixed_abs, tag = 'smem constant byte address 0x4 - core index']
  #allocation1 [shape = 'u32[144,128]{1,0:T(1,128)}', space=vmem, size = 0x12000, scoped, tag = 'internal scratch']
  %s0 = inlined_call_operand.vmem [shape: bf16[392,36], index: 0, kind: input, shape index: {}]
  %s1 = inlined_call_operand.vmem [shape: bf16[36,8], index: 1, kind: input, shape index: {}]
  %s2 = inlined_call_operand.vmem [shape: f32[1,8], index: 2, kind: input, shape index: {}]
  %s3 = inlined_call_operand.vmem [shape: f32[1,8], index: 3, kind: input, shape index: {}]
  %s4 = inlined_call_operand.vmem [shape: f32[392,8], index: 4, kind: output, shape index: {}]
  %s5 = sld [smem:[#allocation0]]
  $region26: #{conv2d_bn_relu.1} parent=0
    _
  %s7 = ssub.s32 1, %s5
  %s8 = scalar_select 0, %s7, %s5
  // Predicated region
  $region2: #{conv2d_bn_relu.1} parent=0 // pred_check
    _
  $region3: #{conv2d_bn_relu.1} parent=0 // pred_check_branch
    %10 = sbr.rel (0) target = $region5
  $region4: #{conv2d_bn_relu.1} parent=0 // pred_region
    _
  $region5: #{conv2d_bn_relu.1} parent=0 // pred_fallthru
    _
  // Predicated region
  $region6: #{conv2d_bn_relu.1} parent=0 // pred_check
    _
  $region7: #{conv2d_bn_relu.1} parent=0 // pred_check_branch
    %12 = sbr.rel (0) target = $region9
  $region8: #{conv2d_bn_relu.1} parent=0 // pred_region
    _
  $region9: #{conv2d_bn_relu.1} parent=0 // pred_fallthru
    _
  // Predicated region
  $region10: #{conv2d_bn_relu.1} parent=0 // pred_check
    _
  $region11: #{conv2d_bn_relu.1} parent=0 // pred_check_branch
    %14 = sbr.rel (0) target = $region13
  $region12: #{conv2d_bn_relu.1} parent=0 // pred_region
    _
  $region13: #{conv2d_bn_relu.1} parent=0 // pred_fallthru
    _
  // Predicated region
  $region14: #{conv2d_bn_relu.1} parent=0 // pred_check
    _
  $region15: #{conv2d_bn_relu.1} parent=0 // pred_check_branch
    %16 = sbr.rel (0) target = $region17
  $region16: #{conv2d_bn_relu.1} parent=0 // pred_region
    _
  $region17: #{conv2d_bn_relu.1} parent=0 // pred_fallthru
    _
  %v18 = vld [vmem:[%s0] sm:$0xf]
  %v19 = vld [vmem:[%s0 + $0x4] sm:$0xf]
  %v20 = vld [vmem:[%s0 + $0x8] sm:$0xf]
  %v21 = vld [vmem:[%s0 + $0xc] sm:$0xf]
  %v22 = vld [vmem:[%s0 + $0x10] sm:$0xf]
  %v23 = vld [vmem:[%s0 + $0x14] sm:$0xf]
  %v24 = vld [vmem:[%s0 + $0x18] sm:$0xf]
  %v25 = vld [vmem:[%s0 + $0x1c] sm:$0xf]
  %v26 = vld [vmem:[%s0 + $0x20] sm:$0xf]
  %v27 = vld [vmem:[%s0 + $0x24] sm:$0xf]
  %v28 = vld [vmem:[%s0 + $0x28] sm:$0xf]
  %v29 = vld [vmem:[%s0 + $0x2c] sm:$0xf]
  %v30 = vld [vmem:[%s0 + $0x30] sm:$0xf]
  %v31 = vld [vmem:[%s0 + $0x34] sm:$0xf]
  %v32 = vld [vmem:[%s0 + $0x38] sm:$0xf]
  %v33 = vld [vmem:[%s0 + $0x3c] sm:$0xf]
  %v34 = vld [vmem:[%s0 + $0x40] sm:$0xf]
  %v35 = vld [vmem:[%s0 + $0x44] sm:$0xf]
  %v36 = vld [vmem:[%s0 + $0x48] sm:$0xf]
  %v37 = vld [vmem:[%s0 + $0x4c] sm:$0xf]
  %v38 = vld [vmem:[%s0 + $0x50] sm:$0xf]
  %v39 = vld [vmem:[%s0 + $0x54] sm:$0xf]
  %v40 = vld [vmem:[%s0 + $0x58] sm:$0xf]
  %v41 = vld [vmem:[%s0 + $0x5c] sm:$0xf]
  %v42 = vld [vmem:[%s0 + $0x60] sm:$0xf]
  %v43 = vld [vmem:[%s0 + $0x64] sm:$0xf]
  %v44 = vld [vmem:[%s0 + $0x68] sm:$0xf]
  %v45 = vld [vmem:[%s0 + $0x6c] sm:$0xf]
  %v46 = vld [vmem:[%s0 + $0x70] sm:$0xf]
  %v47 = vld [vmem:[%s0 + $0x74] sm:$0xf]
  %v48 = vld [vmem:[%s0 + $0x78] sm:$0xf]
  %v49 = vld [vmem:[%s0 + $0x7c] sm:$0xf]
  %v50 = vld [vmem:[%s0 + $0x80] sm:$0xf]
  %v51 = vld [vmem:[%s0 + $0x84] sm:$0xf]
  %v52 = vld [vmem:[%s0 + $0x88] sm:$0xf]
  %v53 = vld [vmem:[%s0 + $0x8c] sm:$0xf]
  %v54 = vld [vmem:[%s0 + $0x90] sm:$0xf]
  %v55 = vld [vmem:[%s0 + $0x94] sm:$0xf]
  %v56 = vld [vmem:[%s0 + $0x98] sm:$0xf]
  %v57 = vld [vmem:[%s0 + $0x9c] sm:$0xf]
  %v58 = vld [vmem:[%s0 + $0xa0] sm:$0xf]
  %v59 = vld [vmem:[%s0 + $0xa4] sm:$0xf]
  %v60 = vld [vmem:[%s0 + $0xa8] sm:$0xf]
  %v61 = vld [vmem:[%s0 + $0xac] sm:$0xf]
  %v62 = vld [vmem:[%s0 + $0xb0] sm:$0xf]
  %v63 = vld [vmem:[%s0 + $0xb4] sm:$0xf]
  %v64 = vld [vmem:[%s0 + $0xb8] sm:$0xf]
  %v65 = vld [vmem:[%s0 + $0xbc] sm:$0xf]
  %v66 = vld [vmem:[%s0 + $0xc0] sm:$0xf]
  %v67 = vld [vmem:[%s1] sm:$0xf]
  %v68 = vld [vmem:[%s1 + $0x4] sm:$0xf]
  %v69 = vld [vmem:[%s1 + $0x8] sm:$0xf]
  %v70 = vld [vmem:[%s1 + $0xc] sm:$0xf]
  %v71 = vld [vmem:[%s1 + $0x10] sm:$0x3]
  %v121 = vunpack.c.l.b16 %v18
  %v122 = vunpack.c.l.b16 %v19
  %v123 = vunpack.c.l.b16 %v20
  %v124 = vunpack.c.l.b16 %v21
  %v125 = vunpack.c.l.b16 %v22
  %v126 = vunpack.c.l.b16 %v23
  %v127 = vunpack.c.l.b16 %v24
  %v128 = vunpack.c.l.b16 %v25
  %v129 = vunpack.c.l.b16 %v26
  %v130 = vunpack.c.l.b16 %v27
  %v131 = vunpack.c.l.b16 %v28
  %v132 = vunpack.c.l.b16 %v29
  %v133 = vunpack.c.l.b16 %v30
  %v134 = vunpack.c.l.b16 %v31
  %v135 = vunpack.c.l.b16 %v32
  %v136 = vunpack.c.l.b16 %v33
  %v137 = vunpack.c.l.b16 %v34
  %v138 = vunpack.c.l.b16 %v35
  %v139 = vunpack.c.l.b16 %v36
  %v140 = vunpack.c.l.b16 %v37
  %v141 = vunpack.c.l.b16 %v38
  %v142 = vunpack.c.l.b16 %v39
  %v143 = vunpack.c.l.b16 %v40
  %v144 = vunpack.c.l.b16 %v41
  %v145 = vunpack.c.l.b16 %v42
  %v146 = vunpack.c.l.b16 %v43
  %v147 = vunpack.c.l.b16 %v44
  %v148 = vunpack.c.l.b16 %v45
  %v149 = vunpack.c.l.b16 %v46
  %v150 = vunpack.c.l.b16 %v47
  %v151 = vunpack.c.l.b16 %v48
  %v152 = vunpack.c.l.b16 %v49
  %v153 = vunpack.c.l.b16 %v50
  %v154 = vunpack.c.l.b16 %v51
  %v155 = vunpack.c.l.b16 %v52
  %v156 = vunpack.c.l.b16 %v53
  %v157 = vunpack.c.l.b16 %v54
  %v158 = vunpack.c.l.b16 %v55
  %v159 = vunpack.c.l.b16 %v56
  %v160 = vunpack.c.l.b16 %v57
  %v161 = vunpack.c.l.b16 %v58
  %v162 = vunpack.c.l.b16 %v59
  %v163 = vunpack.c.l.b16 %v60
  %v164 = vunpack.c.l.b16 %v61
  %v165 = vunpack.c.l.b16 %v62
  %v166 = vunpack.c.l.b16 %v63
  %v167 = vunpack.c.l.b16 %v64
  %v168 = vunpack.c.l.b16 %v65
  %v169 = vunpack.c.l.b16 %v66
  %v170 = vpack.c.b16 %v122, %v121
  %v171 = vpack.c.b16 %v124, %v123
  %v172 = vpack.c.b16 %v126, %v125
  %v173 = vpack.c.b16 %v128, %v127
  %v174 = vpack.c.b16 %v130, %v129
  %v175 = vpack.c.b16 %v132, %v131
  %v176 = vpack.c.b16 %v134, %v133
  %v177 = vpack.c.b16 %v136, %v135
  %v178 = vpack.c.b16 %v138, %v137
  %v179 = vpack.c.b16 %v140, %v139
  %v180 = vpack.c.b16 %v142, %v141
  %v181 = vpack.c.b16 %v144, %v143
  %v182 = vpack.c.b16 %v146, %v145
  %v183 = vpack.c.b16 %v148, %v147
  %v184 = vpack.c.b16 %v150, %v149
  %v185 = vpack.c.b16 %v152, %v151
  %v186 = vpack.c.b16 %v154, %v153
  %v187 = vpack.c.b16 %v156, %v155
  %v188 = vpack.c.b16 %v158, %v157
  %v189 = vpack.c.b16 %v160, %v159
  %v190 = vpack.c.b16 %v162, %v161
  %v191 = vpack.c.b16 %v164, %v163
  %v192 = vpack.c.b16 %v166, %v165
  %v193 = vpack.c.b16 %v168, %v167
  %v194 = vpack.c.b16 %v169, %v169
  %v200 = vunpack.c.l.b16 %v67
  %v201 = vunpack.c.l.b16 %v68
  %v202 = vunpack.c.l.b16 %v69
  %v203 = vunpack.c.l.b16 %v70
  %v204 = vunpack.c.l.b16 %v71
  %v205 = vpack.c.b16 %v201, %v200
  %v206 = vpack.c.b16 %v203, %v202
  %v207 = vpack.c.b16 %v204, %v204
  %vm210 = vcmask 293888
  %v212 = vsel %vm210, %v170, 0
  %v215 = vsel %vm210, %v171, 0
  %v218 = vsel %vm210, %v172, 0
  %v221 = vsel %vm210, %v173, 0
  %v224 = vsel %vm210, %v174, 0
  %v227 = vsel %vm210, %v175, 0
  %v230 = vsel %vm210, %v176, 0
  %v233 = vsel %vm210, %v177, 0
  %v236 = vsel %vm210, %v178, 0
  %v239 = vsel %vm210, %v179, 0
  %v242 = vsel %vm210, %v180, 0
  %v245 = vsel %vm210, %v181, 0
  %v248 = vsel %vm210, %v182, 0
  %v251 = vsel %vm210, %v183, 0
  %v254 = vsel %vm210, %v184, 0
  %v257 = vsel %vm210, %v185, 0
  %v260 = vsel %vm210, %v186, 0
  %v263 = vsel %vm210, %v187, 0
  %v266 = vsel %vm210, %v188, 0
  %v269 = vsel %vm210, %v189, 0
  %v272 = vsel %vm210, %v190, 0
  %v275 = vsel %vm210, %v191, 0
  %v278 = vsel %vm210, %v192, 0
  %v281 = vsel %vm210, %v193, 0
  %v284 = vsel %vm210, %v194, 0
  %vm286 = vcmask 1041408
  %v288 = vsel %vm286, %v207, 0
  %290 = vmatprep.subr.bf16.mxu0 0
  %291 = vmatpush1.bf16.msra.mxu0 %v205
  %292 = vmatprep.subr.bf16.mxu0 0
  %293 = vmatpush1.bf16.msra.mxu0 %v206
  %294 = vmatprep.subr.bf16.mxu0 0
  %295 = vmatpush1.bf16.msra.mxu0 %v288
  %296 = vmatprep.subr.bf16.mxu0 0
  %297 = vmatpush1.bf16.msra.mxu0 0
  %298 = vmatprep.subr.bf16.mxu0 0
  %299 = vmatpush1.bf16.msra.mxu0 0
  %300 = vmatprep.subr.bf16.mxu0 0
  %301 = vmatpush1.bf16.msra.mxu0 0
  %302 = vmatprep.subr.bf16.mxu0 0
  %303 = vmatpush1.bf16.msra.mxu0 0
  %304 = vmatprep.subr.bf16.mxu0 0
  %305 = vmatpush1.bf16.msra.mxu0 0
  %306 = vmatprep.subr.bf16.mxu0 0
  %307 = vmatpush1.bf16.msra.mxu0 0
  %308 = vmatprep.subr.bf16.mxu0 0
  %309 = vmatpush1.bf16.msra.mxu0 0
  %310 = vmatprep.subr.bf16.mxu0 0
  %311 = vmatpush1.bf16.msra.mxu0 0
  %312 = vmatprep.subr.bf16.mxu0 0
  %313 = vmatpush1.bf16.msra.mxu0 0
  %314 = vmatprep.subr.bf16.mxu0 0
  %315 = vmatpush1.bf16.msra.mxu0 0
  %316 = vmatprep.subr.bf16.mxu0 0
  %317 = vmatpush1.bf16.msra.mxu0 0
  %318 = vmatprep.subr.bf16.mxu0 0
  %319 = vmatpush1.bf16.msra.mxu0 0
  %320 = vmatprep.subr.bf16.mxu0 0
  %321 = vmatpush1.bf16.msra.mxu0 0
  %322 = vmatprep.mubr.bf16.mxu0 0
  %323 = vmatmul.mubr.bf16.gmra.mrb[0].mxu0 %v212
  %v324 = vpop.f32.mrb[0].mxu0
  %v325 = vadd.f32 0.0, %v324
  %v326 = vpop.f32.mrb[0].mxu0
  %v327 = vpop.f32.mrb[0].mxu0
  %v328 = vadd.f32 0.0, %v327
  %v329 = vpop.f32.mrb[0].mxu0
  %330 = vmatprep.mubr.bf16.mxu0 0
  %331 = vmatmul.mubr.bf16.gmra.mrb[0].mxu0 %v215
  %v332 = vpop.f32.mrb[0].mxu0
  %v333 = vadd.f32 0.0, %v332
  %v334 = vpop.f32.mrb[0].mxu0
  %v335 = vpop.f32.mrb[0].mxu0
  %v336 = vadd.f32 0.0, %v335
  %v337 = vpop.f32.mrb[0].mxu0
  %338 = vmatprep.mubr.bf16.mxu0 0
  %339 = vmatmul.mubr.bf16.gmra.mrb[0].mxu0 %v218
  %v340 = vpop.f32.mrb[0].mxu0
  %v341 = vadd.f32 0.0, %v340
  %v342 = vpop.f32.mrb[0].mxu0
  %v343 = vpop.f32.mrb[0].mxu0
  %v344 = vadd.f32 0.0, %v343
  %v345 = vpop.f32.mrb[0].mxu0
  %346 = vmatprep.mubr.bf16.mxu0 0
  %347 = vmatmul.mubr.bf16.gmra.mrb[0].mxu0 %v221
  %v348 = vpop.f32.mrb[0].mxu0
  %v349 = vadd.f32 0.0, %v348
  %v350 = vpop.f32.mrb[0].mxu0
  %v351 = vpop.f32.mrb[0].mxu0
  %v352 = vadd.f32 0.0, %v351
  %v353 = vpop.f32.mrb[0].mxu0
  %354 = vmatprep.mubr.bf16.mxu0 0
  %355 = vmatmul.mubr.bf16.gmra.mrb[0].mxu0 %v224
  %v356 = vpop.f32.mrb[0].mxu0
  %v357 = vadd.f32 0.0, %v356
  %v358 = vpop.f32.mrb[0].mxu0
  %v359 = vpop.f32.mrb[0].mxu0
  %v360 = vadd.f32 0.0, %v359
  %v361 = vpop.f32.mrb[0].mxu0
  %362 = vmatprep.mubr.bf16.mxu0 0
  %363 = vmatmul.mubr.bf16.gmra.mrb[0].mxu0 %v227
  %v364 = vpop.f32.mrb[0].mxu0
  %v365 = vadd.f32 0.0, %v364
  %v366 = vpop.f32.mrb[0].mxu0
  %v367 = vpop.f32.mrb[0].mxu0
  %v368 = vadd.f32 0.0, %v367
  %v369 = vpop.f32.mrb[0].mxu0
  %370 = vmatprep.mubr.bf16.mxu0 0
  %371 = vmatmul.mubr.bf16.gmra.mrb[0].mxu0 %v230
  %v372 = vpop.f32.mrb[0].mxu0
  %v373 = vadd.f32 0.0, %v372
  %v374 = vpop.f32.mrb[0].mxu0
  %v375 = vpop.f32.mrb[0].mxu0
  %v376 = vadd.f32 0.0, %v375
  %v377 = vpop.f32.mrb[0].mxu0
  %378 = vmatprep.mubr.bf16.mxu0 0
  %379 = vmatmul.mubr.bf16.gmra.mrb[0].mxu0 %v233
  %v380 = vpop.f32.mrb[0].mxu0
  %v381 = vadd.f32 0.0, %v380
  %v382 = vpop.f32.mrb[0].mxu0
  %v383 = vpop.f32.mrb[0].mxu0
  %v384 = vadd.f32 0.0, %v383
  %v385 = vpop.f32.mrb[0].mxu0
  %386 = vmatprep.mubr.bf16.mxu0 0
  %387 = vmatmul.mubr.bf16.gmra.mrb[0].mxu0 %v236
  %v388 = vpop.f32.mrb[0].mxu0
  %v389 = vadd.f32 0.0, %v388
  %v390 = vpop.f32.mrb[0].mxu0
  %v391 = vpop.f32.mrb[0].mxu0
  %v392 = vadd.f32 0.0, %v391
  %v393 = vpop.f32.mrb[0].mxu0
  %394 = vmatprep.mubr.bf16.mxu0 0
  %395 = vmatmul.mubr.bf16.gmra.mrb[0].mxu0 %v239
  %v396 = vpop.f32.mrb[0].mxu0
  %v397 = vadd.f32 0.0, %v396
  %v398 = vpop.f32.mrb[0].mxu0
  %v399 = vpop.f32.mrb[0].mxu0
  %v400 = vadd.f32 0.0, %v399
  %v401 = vpop.f32.mrb[0].mxu0
  %402 = vmatprep.mubr.bf16.mxu0 0
  %403 = vmatmul.mubr.bf16.gmra.mrb[0].mxu0 %v242
  %v404 = vpop.f32.mrb[0].mxu0
  %v405 = vadd.f32 0.0, %v404
  %v406 = vpop.f32.mrb[0].mxu0
  %v407 = vpop.f32.mrb[0].mxu0
  %v408 = vadd.f32 0.0, %v407
  %v409 = vpop.f32.mrb[0].mxu0
  %410 = vmatprep.mubr.bf16.mxu0 0
  %411 = vmatmul.mubr.bf16.gmra.mrb[0].mxu0 %v245
  %v412 = vpop.f32.mrb[0].mxu0
  %v413 = vadd.f32 0.0, %v412
  %v414 = vpop.f32.mrb[0].mxu0
  %v415 = vpop.f32.mrb[0].mxu0
  %v416 = vadd.f32 0.0, %v415
  %v417 = vpop.f32.mrb[0].mxu0
  %418 = vmatprep.mubr.bf16.mxu0 0
  %419 = vmatmul.mubr.bf16.gmra.mrb[0].mxu0 %v248
  %v420 = vpop.f32.mrb[0].mxu0
  %v421 = vadd.f32 0.0, %v420
  %v422 = vpop.f32.mrb[0].mxu0
  %v423 = vpop.f32.mrb[0].mxu0
  %v424 = vadd.f32 0.0, %v423
  %v425 = vpop.f32.mrb[0].mxu0
  %426 = vmatprep.mubr.bf16.mxu0 0
  %427 = vmatmul.mubr.bf16.gmra.mrb[0].mxu0 %v251
  %v428 = vpop.f32.mrb[0].mxu0
  %v429 = vadd.f32 0.0, %v428
  %v430 = vpop.f32.mrb[0].mxu0
  %v431 = vpop.f32.mrb[0].mxu0
  %v432 = vadd.f32 0.0, %v431
  %v433 = vpop.f32.mrb[0].mxu0
  %434 = vmatprep.mubr.bf16.mxu0 0
  %435 = vmatmul.mubr.bf16.gmra.mrb[0].mxu0 %v254
  %v436 = vpop.f32.mrb[0].mxu0
  %v437 = vadd.f32 0.0, %v436
  %v438 = vpop.f32.mrb[0].mxu0
  %v439 = vpop.f32.mrb[0].mxu0
  %v440 = vadd.f32 0.0, %v439
  %v441 = vpop.f32.mrb[0].mxu0
  %442 = vmatprep.mubr.bf16.mxu0 0
  %443 = vmatmul.mubr.bf16.gmra.mrb[0].mxu0 %v257
  %v444 = vpop.f32.mrb[0].mxu0
  %v445 = vadd.f32 0.0, %v444
  %v446 = vpop.f32.mrb[0].mxu0
  %v447 = vpop.f32.mrb[0].mxu0
  %v448 = vadd.f32 0.0, %v447
  %v449 = vpop.f32.mrb[0].mxu0
  %450 = vmatprep.mubr.bf16.mxu0 0
  %451 = vmatmul.mubr.bf16.gmra.mrb[0].mxu0 %v260
  %v452 = vpop.f32.mrb[0].mxu0
  %v453 = vadd.f32 0.0, %v452
  %v454 = vpop.f32.mrb[0].mxu0
  %v455 = vpop.f32.mrb[0].mxu0
  %v456 = vadd.f32 0.0, %v455
  %v457 = vpop.f32.mrb[0].mxu0
  %458 = vmatprep.mubr.bf16.mxu0 0
  %459 = vmatmul.mubr.bf16.gmra.mrb[0].mxu0 %v263
  %v460 = vpop.f32.mrb[0].mxu0
  %v461 = vadd.f32 0.0, %v460
  %v462 = vpop.f32.mrb[0].mxu0
  %v463 = vpop.f32.mrb[0].mxu0
  %v464 = vadd.f32 0.0, %v463
  %v465 = vpop.f32.mrb[0].mxu0
  %466 = vmatprep.mubr.bf16.mxu0 0
  %467 = vmatmul.mubr.bf16.gmra.mrb[0].mxu0 %v266
  %v468 = vpop.f32.mrb[0].mxu0
  %v469 = vadd.f32 0.0, %v468
  %v470 = vpop.f32.mrb[0].mxu0
  %v471 = vpop.f32.mrb[0].mxu0
  %v472 = vadd.f32 0.0, %v471
  %v473 = vpop.f32.mrb[0].mxu0
  %474 = vmatprep.mubr.bf16.mxu0 0
  %475 = vmatmul.mubr.bf16.gmra.mrb[0].mxu0 %v269
  %v476 = vpop.f32.mrb[0].mxu0
  %v477 = vadd.f32 0.0, %v476
  %v478 = vpop.f32.mrb[0].mxu0
  %v479 = vpop.f32.mrb[0].mxu0
  %v480 = vadd.f32 0.0, %v479
  %v481 = vpop.f32.mrb[0].mxu0
  %482 = vmatprep.mubr.bf16.mxu0 0
  %483 = vmatmul.mubr.bf16.gmra.mrb[0].mxu0 %v272
  %v484 = vpop.f32.mrb[0].mxu0
  %v485 = vadd.f32 0.0, %v484
  %v486 = vpop.f32.mrb[0].mxu0
  %v487 = vpop.f32.mrb[0].mxu0
  %v488 = vadd.f32 0.0, %v487
  %v489 = vpop.f32.mrb[0].mxu0
  %490 = vmatprep.mubr.bf16.mxu0 0
  %491 = vmatmul.mubr.bf16.gmra.mrb[0].mxu0 %v275
  %v492 = vpop.f32.mrb[0].mxu0
  %v493 = vadd.f32 0.0, %v492
  %v494 = vpop.f32.mrb[0].mxu0
  %v495 = vpop.f32.mrb[0].mxu0
  %v496 = vadd.f32 0.0, %v495
  %v497 = vpop.f32.mrb[0].mxu0
  %498 = vmatprep.mubr.bf16.mxu0 0
  %499 = vmatmul.mubr.bf16.gmra.mrb[0].mxu0 %v278
  %v500 = vpop.f32.mrb[0].mxu0
  %v501 = vadd.f32 0.0, %v500
  %v502 = vpop.f32.mrb[0].mxu0
  %v503 = vpop.f32.mrb[0].mxu0
  %v504 = vadd.f32 0.0, %v503
  %v505 = vpop.f32.mrb[0].mxu0
  %506 = vmatprep.mubr.bf16.mxu0 0
  %507 = vmatmul.mubr.bf16.gmra.mrb[0].mxu0 %v281
  %v508 = vpop.f32.mrb[0].mxu0
  %v509 = vadd.f32 0.0, %v508
  %v510 = vpop.f32.mrb[0].mxu0
  %v511 = vpop.f32.mrb[0].mxu0
  %v512 = vadd.f32 0.0, %v511
  %v513 = vpop.f32.mrb[0].mxu0
  %514 = vmatprep.mubr.bf16.mxu0 0
  %515 = vmatmul.mubr.bf16.gmra.mrb[0].mxu0 %v284
  %v516 = vpop.f32.mrb[0].mxu0
  %v517 = vadd.f32 0.0, %v516
  %v518 = vpop.f32.mrb[0].mxu0
  %v519 = vpop.f32.mrb[0].mxu0
  %v520 = vpop.f32.mrb[0].mxu0
  %521 = vdwg.mxu0
  %vm522 = vcmask 64512
  %v523 = vsel %vm522, %v325, 0.0
  %v524 = vsel %vm522, %v328, 0.0
  %v525 = vadd.f32 %v523, %v524
  %v526 = vsel %vm522, %v333, 0.0
  %v527 = vadd.f32 %v525, %v526
  %v528 = vsel %vm522, %v336, 0.0
  %v529 = vadd.f32 %v527, %v528
  %v530 = vsel %vm522, %v341, 0.0
  %v531 = vadd.f32 %v529, %v530
  %v532 = vsel %vm522, %v344, 0.0
  %v533 = vadd.f32 %v531, %v532
  %v534 = vsel %vm522, %v349, 0.0
  %v535 = vadd.f32 %v533, %v534
  %v536 = vsel %vm522, %v352, 0.0
  %v537 = vadd.f32 %v535, %v536
  %v538 = vsel %vm522, %v357, 0.0
  %v539 = vadd.f32 %v537, %v538
  %v540 = vsel %vm522, %v360, 0.0
  %v541 = vadd.f32 %v539, %v540
  %v542 = vsel %vm522, %v365, 0.0
  %v543 = vadd.f32 %v541, %v542
  %v544 = vsel %vm522, %v368, 0.0
  %v545 = vadd.f32 %v543, %v544
  %v546 = vsel %vm522, %v373, 0.0
  %v547 = vadd.f32 %v545, %v546
  %v548 = vsel %vm522, %v376, 0.0
  %v549 = vadd.f32 %v547, %v548
  %v550 = vsel %vm522, %v381, 0.0
  %v551 = vadd.f32 %v549, %v550
  %v552 = vsel %vm522, %v384, 0.0
  %v553 = vadd.f32 %v551, %v552
  %v554 = vsel %vm522, %v389, 0.0
  %v555 = vadd.f32 %v553, %v554
  %v556 = vsel %vm522, %v392, 0.0
  %v557 = vadd.f32 %v555, %v556
  %v558 = vsel %vm522, %v397, 0.0
  %v559 = vadd.f32 %v557, %v558
  %v560 = vsel %vm522, %v400, 0.0
  %v561 = vadd.f32 %v559, %v560
  %v562 = vsel %vm522, %v405, 0.0
  %v563 = vadd.f32 %v561, %v562
  %v564 = vsel %vm522, %v408, 0.0
  %v565 = vadd.f32 %v563, %v564
  %v566 = vsel %vm522, %v413, 0.0
  %v567 = vadd.f32 %v565, %v566
  %v568 = vsel %vm522, %v416, 0.0
  %v569 = vadd.f32 %v567, %v568
  %v570 = vsel %vm522, %v421, 0.0
  %v571 = vadd.f32 %v569, %v570
  %v572 = vsel %vm522, %v424, 0.0
  %v573 = vadd.f32 %v571, %v572
  %v574 = vsel %vm522, %v429, 0.0
  %v575 = vadd.f32 %v573, %v574
  %v576 = vsel %vm522, %v432, 0.0
  %v577 = vadd.f32 %v575, %v576
  %v578 = vsel %vm522, %v437, 0.0
  %v579 = vadd.f32 %v577, %v578
  %v580 = vsel %vm522, %v440, 0.0
  %v581 = vadd.f32 %v579, %v580
  %v582 = vsel %vm522, %v445, 0.0
  %v583 = vadd.f32 %v581, %v582
  %v584 = vsel %vm522, %v448, 0.0
  %v585 = vadd.f32 %v583, %v584
  %v586 = vsel %vm522, %v453, 0.0
  %v587 = vadd.f32 %v585, %v586
  %v588 = vsel %vm522, %v456, 0.0
  %v589 = vadd.f32 %v587, %v588
  %v590 = vsel %vm522, %v461, 0.0
  %v591 = vadd.f32 %v589, %v590
  %v592 = vsel %vm522, %v464, 0.0
  %v593 = vadd.f32 %v591, %v592
  %v594 = vsel %vm522, %v469, 0.0
  %v595 = vadd.f32 %v593, %v594
  %v596 = vsel %vm522, %v472, 0.0
  %v597 = vadd.f32 %v595, %v596
  %v598 = vsel %vm522, %v477, 0.0
  %v599 = vadd.f32 %v597, %v598
  %v600 = vsel %vm522, %v480, 0.0
  %v601 = vadd.f32 %v599, %v600
  %v602 = vsel %vm522, %v485, 0.0
  %v603 = vadd.f32 %v601, %v602
  %v604 = vsel %vm522, %v488, 0.0
  %v605 = vadd.f32 %v603, %v604
  %v606 = vsel %vm522, %v493, 0.0
  %v607 = vadd.f32 %v605, %v606
  %v608 = vsel %vm522, %v496, 0.0
  %v609 = vadd.f32 %v607, %v608
  %v610 = vsel %vm522, %v501, 0.0
  %v611 = vadd.f32 %v609, %v610
  %v612 = vsel %vm522, %v504, 0.0
  %v613 = vadd.f32 %v611, %v612
  %v614 = vsel %vm522, %v509, 0.0
  %v615 = vadd.f32 %v613, %v614
  %v616 = vsel %vm522, %v512, 0.0
  %v617 = vadd.f32 %v615, %v616
  %v618 = vsel %vm522, %v517, 0.0
  %v619 = vadd.f32 %v617, %v618
  %v620 = vrot.slane %v619, 4
  %v621 = vadd.f32 %v619, %v620
  %v622 = vrot.slane %v621, 2
  %v623 = vadd.f32 %v621, %v622
  %v624 = vrot.slane %v623, 1
  %v625 = vadd.f32 %v623, %v624
  %v626 = vmul.f32 %v625, 0.0025510204
  %v627 = vlaneseq
  %v628 = vshrl.u32 %v627, 7
  %v629 = vadd.s32 %v628, 8
  %v630 = vadd.s32 %v628, 16
  %v631 = vadd.s32 %v628, 24
  %v632 = vadd.s32 %v628, 32
  %v633 = vadd.s32 %v628, 40
  %v634 = vadd.s32 %v628, 48
  %v635 = vadd.s32 %v628, 56
  %v636 = vadd.s32 %v628, 64
  %v637 = vadd.s32 %v628, 72
  %v638 = vadd.s32 %v628, 80
  %v639 = vadd.s32 %v628, 88
  %v640 = vadd.s32 %v628, 96
  %v641 = vadd.s32 %v628, 104
  %v642 = vadd.s32 %v628, 112
  %v643 = vadd.s32 %v628, 120
  %v644 = vadd.s32 %v628, 128
  %v645 = vadd.s32 %v628, 136
  %v646 = vadd.s32 %v628, 144
  %v647 = vadd.s32 %v628, 152
  %v648 = vadd.s32 %v628, 160
  %v649 = vadd.s32 %v628, 168
  %v650 = vadd.s32 %v628, 176
  %v651 = vadd.s32 %v628, 184
  %v652 = vadd.s32 %v628, 192
  %v653 = vadd.s32 %v628, 200
  %v654 = vadd.s32 %v628, 208
  %v655 = vadd.s32 %v628, 216
  %v656 = vadd.s32 %v628, 224
  %v657 = vadd.s32 %v628, 232
  %v658 = vadd.s32 %v628, 240
  %v659 = vadd.s32 %v628, 248
  %v660 = vadd.s32 %v628, 256
  %v661 = vadd.s32 %v628, 264
  %v662 = vadd.s32 %v628, 272
  %v663 = vadd.s32 %v628, 280
  %v664 = vadd.s32 %v628, 288
  %v665 = vadd.s32 %v628, 296
  %v666 = vadd.s32 %v628, 304
  %v667 = vadd.s32 %v628, 312
  %v668 = vadd.s32 %v628, 320
  %v669 = vadd.s32 %v628, 328
  %v670 = vadd.s32 %v628, 336
  %v671 = vadd.s32 %v628, 344
  %v672 = vadd.s32 %v628, 352
  %v673 = vadd.s32 %v628, 360
  %v674 = vadd.s32 %v628, 368
  %v675 = vadd.s32 %v628, 376
  %v676 = vadd.s32 %v628, 384
  %vm677 = vcmp.lt.s32.totalorder %v628, 392
  %vm678 = vcmp.lt.s32.totalorder %v629, 392
  %vm679 = vcmp.lt.s32.totalorder %v630, 392
  %vm680 = vcmp.lt.s32.totalorder %v631, 392
  %vm681 = vcmp.lt.s32.totalorder %v632, 392
  %vm682 = vcmp.lt.s32.totalorder %v633, 392
  %vm683 = vcmp.lt.s32.totalorder %v634, 392
  %vm684 = vcmp.lt.s32.totalorder %v635, 392
  %vm685 = vcmp.lt.s32.totalorder %v636, 392
  %vm686 = vcmp.lt.s32.totalorder %v637, 392
  %vm687 = vcmp.lt.s32.totalorder %v638, 392
  %vm688 = vcmp.lt.s32.totalorder %v639, 392
  %vm689 = vcmp.lt.s32.totalorder %v640, 392
  %vm690 = vcmp.lt.s32.totalorder %v641, 392
  %vm691 = vcmp.lt.s32.totalorder %v642, 392
  %vm692 = vcmp.lt.s32.totalorder %v643, 392
  %vm693 = vcmp.lt.s32.totalorder %v644, 392
  %vm694 = vcmp.lt.s32.totalorder %v645, 392
  %vm695 = vcmp.lt.s32.totalorder %v646, 392
  %vm696 = vcmp.lt.s32.totalorder %v647, 392
  %vm697 = vcmp.lt.s32.totalorder %v648, 392
  %vm698 = vcmp.lt.s32.totalorder %v649, 392
  %vm699 = vcmp.lt.s32.totalorder %v650, 392
  %vm700 = vcmp.lt.s32.totalorder %v651, 392
  %vm701 = vcmp.lt.s32.totalorder %v652, 392
  %vm702 = vcmp.lt.s32.totalorder %v653, 392
  %vm703 = vcmp.lt.s32.totalorder %v654, 392
  %vm704 = vcmp.lt.s32.totalorder %v655, 392
  %vm705 = vcmp.lt.s32.totalorder %v656, 392
  %vm706 = vcmp.lt.s32.totalorder %v657, 392
  %vm707 = vcmp.lt.s32.totalorder %v658, 392
  %vm708 = vcmp.lt.s32.totalorder %v659, 392
  %vm709 = vcmp.lt.s32.totalorder %v660, 392
  %vm710 = vcmp.lt.s32.totalorder %v661, 392
  %vm711 = vcmp.lt.s32.totalorder %v662, 392
  %vm712 = vcmp.lt.s32.totalorder %v663, 392
  %vm713 = vcmp.lt.s32.totalorder %v664, 392
  %vm714 = vcmp.lt.s32.totalorder %v665, 392
  %vm715 = vcmp.lt.s32.totalorder %v666, 392
  %vm716 = vcmp.lt.s32.totalorder %v667, 392
  %vm717 = vcmp.lt.s32.totalorder %v668, 392
  %vm718 = vcmp.lt.s32.totalorder %v669, 392
  %vm719 = vcmp.lt.s32.totalorder %v670, 392
  %vm720 = vcmp.lt.s32.totalorder %v671, 392
  %vm721 = vcmp.lt.s32.totalorder %v672, 392
  %vm722 = vcmp.lt.s32.totalorder %v673, 392
  %vm723 = vcmp.lt.s32.totalorder %v674, 392
  %vm724 = vcmp.lt.s32.totalorder %v675, 392
  %vm725 = vcmp.lt.s32.totalorder %v676, 392
  %v726 = vsub.f32 %v325, %v626
  %v727 = vsub.f32 %v328, %v626
  %v728 = vsub.f32 %v333, %v626
  %v729 = vsub.f32 %v336, %v626
  %v730 = vsub.f32 %v341, %v626
  %v731 = vsub.f32 %v344, %v626
  %v732 = vsub.f32 %v349, %v626
  %v733 = vsub.f32 %v352, %v626
  %v734 = vsub.f32 %v357, %v626
  %v735 = vsub.f32 %v360, %v626
  %v736 = vsub.f32 %v365, %v626
  %v737 = vsub.f32 %v368, %v626
  %v738 = vsub.f32 %v373, %v626
  %v739 = vsub.f32 %v376, %v626
  %v740 = vsub.f32 %v381, %v626
  %v741 = vsub.f32 %v384, %v626
  %v742 = vsub.f32 %v389, %v626
  %v743 = vsub.f32 %v392, %v626
  %v744 = vsub.f32 %v397, %v626
  %v745 = vsub.f32 %v400, %v626
  %v746 = vsub.f32 %v405, %v626
  %v747 = vsub.f32 %v408, %v626
  %v748 = vsub.f32 %v413, %v626
  %v749 = vsub.f32 %v416, %v626
  %v750 = vsub.f32 %v421, %v626
  %v751 = vsub.f32 %v424, %v626
  %v752 = vsub.f32 %v429, %v626
  %v753 = vsub.f32 %v432, %v626
  %v754 = vsub.f32 %v437, %v626
  %v755 = vsub.f32 %v440, %v626
  %v756 = vsub.f32 %v445, %v626
  %v757 = vsub.f32 %v448, %v626
  %v758 = vsub.f32 %v453, %v626
  %v759 = vsub.f32 %v456, %v626
  %v760 = vsub.f32 %v461, %v626
  %v761 = vsub.f32 %v464, %v626
  %v762 = vsub.f32 %v469, %v626
  %v763 = vsub.f32 %v472, %v626
  %v764 = vsub.f32 %v477, %v626
  %v765 = vsub.f32 %v480, %v626
  %v766 = vsub.f32 %v485, %v626
  %v767 = vsub.f32 %v488, %v626
  %v768 = vsub.f32 %v493, %v626
  %v769 = vsub.f32 %v496, %v626
  %v770 = vsub.f32 %v501, %v626
  %v771 = vsub.f32 %v504, %v626
  %v772 = vsub.f32 %v509, %v626
  %v773 = vsub.f32 %v512, %v626
  %v774 = vsub.f32 %v517, %v626
  %v775 = vsel %vm677, %v726, 0.0
  %v776 = vsel %vm678, %v727, 0.0
  %v777 = vsel %vm679, %v728, 0.0
  %v778 = vsel %vm680, %v729, 0.0
  %v779 = vsel %vm681, %v730, 0.0
  %v780 = vsel %vm682, %v731, 0.0
  %v781 = vsel %vm683, %v732, 0.0
  %v782 = vsel %vm684, %v733, 0.0
  %v783 = vsel %vm685, %v734, 0.0
  %v784 = vsel %vm686, %v735, 0.0
  %v785 = vsel %vm687, %v736, 0.0
  %v786 = vsel %vm688, %v737, 0.0
  %v787 = vsel %vm689, %v738, 0.0
  %v788 = vsel %vm690, %v739, 0.0
  %v789 = vsel %vm691, %v740, 0.0
  %v790 = vsel %vm692, %v741, 0.0
  %v791 = vsel %vm693, %v742, 0.0
  %v792 = vsel %vm694, %v743, 0.0
  %v793 = vsel %vm695, %v744, 0.0
  %v794 = vsel %vm696, %v745, 0.0
  %v795 = vsel %vm697, %v746, 0.0
  %v796 = vsel %vm698, %v747, 0.0
  %v797 = vsel %vm699, %v748, 0.0
  %v798 = vsel %vm700, %v749, 0.0
  %v799 = vsel %vm701, %v750, 0.0
  %v800 = vsel %vm702, %v751, 0.0
  %v801 = vsel %vm703, %v752, 0.0
  %v802 = vsel %vm704, %v753, 0.0
  %v803 = vsel %vm705, %v754, 0.0
  %v804 = vsel %vm706, %v755, 0.0
  %v805 = vsel %vm707, %v756, 0.0
  %v806 = vsel %vm708, %v757, 0.0
  %v807 = vsel %vm709, %v758, 0.0
  %v808 = vsel %vm710, %v759, 0.0
  %v809 = vsel %vm711, %v760, 0.0
  %v810 = vsel %vm712, %v761, 0.0
  %v811 = vsel %vm713, %v762, 0.0
  %v812 = vsel %vm714, %v763, 0.0
  %v813 = vsel %vm715, %v764, 0.0
  %v814 = vsel %vm716, %v765, 0.0
  %v815 = vsel %vm717, %v766, 0.0
  %v816 = vsel %vm718, %v767, 0.0
  %v817 = vsel %vm719, %v768, 0.0
  %v818 = vsel %vm720, %v769, 0.0
  %v819 = vsel %vm721, %v770, 0.0
  %v820 = vsel %vm722, %v771, 0.0
  %v821 = vsel %vm723, %v772, 0.0
  %v822 = vsel %vm724, %v773, 0.0
  %v823 = vsel %vm725, %v774, 0.0
  %v824 = vmul.f32 %v775, %v775
  %v825 = vmul.f32 %v776, %v776
  %v826 = vmul.f32 %v777, %v777
  %v827 = vmul.f32 %v778, %v778
  %v828 = vmul.f32 %v779, %v779
  %v829 = vmul.f32 %v780, %v780
  %v830 = vmul.f32 %v781, %v781
  %v831 = vmul.f32 %v782, %v782
  %v832 = vmul.f32 %v783, %v783
  %v833 = vmul.f32 %v784, %v784
  %v834 = vmul.f32 %v785, %v785
  %v835 = vmul.f32 %v786, %v786
  %v836 = vmul.f32 %v787, %v787
  %v837 = vmul.f32 %v788, %v788
  %v838 = vmul.f32 %v789, %v789
  %v839 = vmul.f32 %v790, %v790
  %v840 = vmul.f32 %v791, %v791
  %v841 = vmul.f32 %v792, %v792
  %v842 = vmul.f32 %v793, %v793
  %v843 = vmul.f32 %v794, %v794
  %v844 = vmul.f32 %v795, %v795
  %v845 = vmul.f32 %v796, %v796
  %v846 = vmul.f32 %v797, %v797
  %v847 = vmul.f32 %v798, %v798
  %v848 = vmul.f32 %v799, %v799
  %v849 = vmul.f32 %v800, %v800
  %v850 = vmul.f32 %v801, %v801
  %v851 = vmul.f32 %v802, %v802
  %v852 = vmul.f32 %v803, %v803
  %v853 = vmul.f32 %v804, %v804
  %v854 = vmul.f32 %v805, %v805
  %v855 = vmul.f32 %v806, %v806
  %v856 = vmul.f32 %v807, %v807
  %v857 = vmul.f32 %v808, %v808
  %v858 = vmul.f32 %v809, %v809
  %v859 = vmul.f32 %v810, %v810
  %v860 = vmul.f32 %v811, %v811
  %v861 = vmul.f32 %v812, %v812
  %v862 = vmul.f32 %v813, %v813
  %v863 = vmul.f32 %v814, %v814
  %v864 = vmul.f32 %v815, %v815
  %v865 = vmul.f32 %v816, %v816
  %v866 = vmul.f32 %v817, %v817
  %v867 = vmul.f32 %v818, %v818
  %v868 = vmul.f32 %v819, %v819
  %v869 = vmul.f32 %v820, %v820
  %v870 = vmul.f32 %v821, %v821
  %v871 = vmul.f32 %v822, %v822
  %v872 = vmul.f32 %v823, %v823
  %v873 = vsel %vm522, %v824, 0.0
  %v874 = vsel %vm522, %v825, 0.0
  %v875 = vadd.f32 %v873, %v874
  %v876 = vsel %vm522, %v826, 0.0
  %v877 = vadd.f32 %v875, %v876
  %v878 = vsel %vm522, %v827, 0.0
  %v879 = vadd.f32 %v877, %v878
  %v880 = vsel %vm522, %v828, 0.0
  %v881 = vadd.f32 %v879, %v880
  %v882 = vsel %vm522, %v829, 0.0
  %v883 = vadd.f32 %v881, %v882
  %v884 = vsel %vm522, %v830, 0.0
  %v885 = vadd.f32 %v883, %v884
  %v886 = vsel %vm522, %v831, 0.0
  %v887 = vadd.f32 %v885, %v886
  %v888 = vsel %vm522, %v832, 0.0
  %v889 = vadd.f32 %v887, %v888
  %v890 = vsel %vm522, %v833, 0.0
  %v891 = vadd.f32 %v889, %v890
  %v892 = vsel %vm522, %v834, 0.0
  %v893 = vadd.f32 %v891, %v892
  %v894 = vsel %vm522, %v835, 0.0
  %v895 = vadd.f32 %v893, %v894
  %v896 = vsel %vm522, %v836, 0.0
  %v897 = vadd.f32 %v895, %v896
  %v898 = vsel %vm522, %v837, 0.0
  %v899 = vadd.f32 %v897, %v898
  %v900 = vsel %vm522, %v838, 0.0
  %v901 = vadd.f32 %v899, %v900
  %v902 = vsel %vm522, %v839, 0.0
  %v903 = vadd.f32 %v901, %v902
  %v904 = vsel %vm522, %v840, 0.0
  %v905 = vadd.f32 %v903, %v904
  %v906 = vsel %vm522, %v841, 0.0
  %v907 = vadd.f32 %v905, %v906
  %v908 = vsel %vm522, %v842, 0.0
  %v909 = vadd.f32 %v907, %v908
  %v910 = vsel %vm522, %v843, 0.0
  %v911 = vadd.f32 %v909, %v910
  %v912 = vsel %vm522, %v844, 0.0
  %v913 = vadd.f32 %v911, %v912
  %v914 = vsel %vm522, %v845, 0.0
  %v915 = vadd.f32 %v913, %v914
  %v916 = vsel %vm522, %v846, 0.0
  %v917 = vadd.f32 %v915, %v916
  %v918 = vsel %vm522, %v847, 0.0
  %v919 = vadd.f32 %v917, %v918
  %v920 = vsel %vm522, %v848, 0.0
  %v921 = vadd.f32 %v919, %v920
  %v922 = vsel %vm522, %v849, 0.0
  %v923 = vadd.f32 %v921, %v922
  %v924 = vsel %vm522, %v850, 0.0
  %v925 = vadd.f32 %v923, %v924
  %v926 = vsel %vm522, %v851, 0.0
  %v927 = vadd.f32 %v925, %v926
  %v928 = vsel %vm522, %v852, 0.0
  %v929 = vadd.f32 %v927, %v928
  %v930 = vsel %vm522, %v853, 0.0
  %v931 = vadd.f32 %v929, %v930
  %v932 = vsel %vm522, %v854, 0.0
  %v933 = vadd.f32 %v931, %v932
  %v934 = vsel %vm522, %v855, 0.0
  %v935 = vadd.f32 %v933, %v934
  %v936 = vsel %vm522, %v856, 0.0
  %v937 = vadd.f32 %v935, %v936
  %v938 = vsel %vm522, %v857, 0.0
  %v939 = vadd.f32 %v937, %v938
  %v940 = vsel %vm522, %v858, 0.0
  %v941 = vadd.f32 %v939, %v940
  %v942 = vsel %vm522, %v859, 0.0
  %v943 = vadd.f32 %v941, %v942
  %v944 = vsel %vm522, %v860, 0.0
  %v945 = vadd.f32 %v943, %v944
  %v946 = vsel %vm522, %v861, 0.0
  %v947 = vadd.f32 %v945, %v946
  %v948 = vsel %vm522, %v862, 0.0
  %v949 = vadd.f32 %v947, %v948
  %v950 = vsel %vm522, %v863, 0.0
  %v951 = vadd.f32 %v949, %v950
  %v952 = vsel %vm522, %v864, 0.0
  %v953 = vadd.f32 %v951, %v952
  %v954 = vsel %vm522, %v865, 0.0
  %v955 = vadd.f32 %v953, %v954
  %v956 = vsel %vm522, %v866, 0.0
  %v957 = vadd.f32 %v955, %v956
  %v958 = vsel %vm522, %v867, 0.0
  %v959 = vadd.f32 %v957, %v958
  %v960 = vsel %vm522, %v868, 0.0
  %v961 = vadd.f32 %v959, %v960
  %v962 = vsel %vm522, %v869, 0.0
  %v963 = vadd.f32 %v961, %v962
  %v964 = vsel %vm522, %v870, 0.0
  %v965 = vadd.f32 %v963, %v964
  %v966 = vsel %vm522, %v871, 0.0
  %v967 = vadd.f32 %v965, %v966
  %v968 = vsel %vm522, %v872, 0.0
  %v969 = vadd.f32 %v967, %v968
  %v970 = vrot.slane %v969, 4
  %v971 = vadd.f32 %v969, %v970
  %v972 = vrot.slane %v971, 2
  %v973 = vadd.f32 %v971, %v972
  %v974 = vrot.slane %v973, 1
  %v975 = vadd.f32 %v973, %v974
  %v976 = vmul.f32 %v975, 0.0025510204
  %v977 = vld [vmem:[%s2] sm:$0x1]
  %v978 = vadd.f32 %v976, 1e-05
  %v979 = vrsqrt.pop %v978
  %v980 = vmul.f32 %v977, %v979
  %v981 = vld [vmem:[%s3] sm:$0x1]
  %v982 = vmul.f32 %v626, %v980
  %v983 = vsub.f32 %v981, %v982
  %v985 = vlaneseq
  %v986 = vshrl.u32 %v985, 7
  %v987 = vsub.s32 0, %v986
  %v988 = vrot.slane %v980, %v987
  %v990 = vmul.f32 %v325, %v988
  %v991 = vmul.f32 %v328, %v988
  %v992 = vmul.f32 %v333, %v988
  %v993 = vmul.f32 %v336, %v988
  %v994 = vmul.f32 %v341, %v988
  %v995 = vmul.f32 %v344, %v988
  %v996 = vmul.f32 %v349, %v988
  %v997 = vmul.f32 %v352, %v988
  %v998 = vmul.f32 %v357, %v988
  %v999 = vmul.f32 %v360, %v988
  %v1000 = vmul.f32 %v365, %v988
  %v1001 = vmul.f32 %v368, %v988
  %v1002 = vmul.f32 %v373, %v988
  %v1003 = vmul.f32 %v376, %v988
  %v1004 = vmul.f32 %v381, %v988
  %v1005 = vmul.f32 %v384, %v988
  %v1006 = vmul.f32 %v389, %v988
  %v1007 = vmul.f32 %v392, %v988
  %v1008 = vmul.f32 %v397, %v988
  %v1009 = vmul.f32 %v400, %v988
  %v1010 = vmul.f32 %v405, %v988
  %v1011 = vmul.f32 %v408, %v988
  %v1012 = vmul.f32 %v413, %v988
  %v1013 = vmul.f32 %v416, %v988
  %v1014 = vmul.f32 %v421, %v988
  %v1015 = vmul.f32 %v424, %v988
  %v1016 = vmul.f32 %v429, %v988
  %v1017 = vmul.f32 %v432, %v988
  %v1018 = vmul.f32 %v437, %v988
  %v1019 = vmul.f32 %v440, %v988
  %v1020 = vmul.f32 %v445, %v988
  %v1021 = vmul.f32 %v448, %v988
  %v1022 = vmul.f32 %v453, %v988
  %v1023 = vmul.f32 %v456, %v988
  %v1024 = vmul.f32 %v461, %v988
  %v1025 = vmul.f32 %v464, %v988
  %v1026 = vmul.f32 %v469, %v988
  %v1027 = vmul.f32 %v472, %v988
  %v1028 = vmul.f32 %v477, %v988
  %v1029 = vmul.f32 %v480, %v988
  %v1030 = vmul.f32 %v485, %v988
  %v1031 = vmul.f32 %v488, %v988
  %v1032 = vmul.f32 %v493, %v988
  %v1033 = vmul.f32 %v496, %v988
  %v1034 = vmul.f32 %v501, %v988
  %v1035 = vmul.f32 %v504, %v988
  %v1036 = vmul.f32 %v509, %v988
  %v1037 = vmul.f32 %v512, %v988
  %v1038 = vmul.f32 %v517, %v988
  %v1040 = vlaneseq
  %v1041 = vshrl.u32 %v1040, 7
  %v1042 = vsub.s32 0, %v1041
  %v1043 = vrot.slane %v983, %v1042
  %v1045 = vadd.f32 %v990, %v1043
  %v1046 = vadd.f32 %v991, %v1043
  %v1047 = vadd.f32 %v992, %v1043
  %v1048 = vadd.f32 %v993, %v1043
  %v1049 = vadd.f32 %v994, %v1043
  %v1050 = vadd.f32 %v995, %v1043
  %v1051 = vadd.f32 %v996, %v1043
  %v1052 = vadd.f32 %v997, %v1043
  %v1053 = vadd.f32 %v998, %v1043
  %v1054 = vadd.f32 %v999, %v1043
  %v1055 = vadd.f32 %v1000, %v1043
  %v1056 = vadd.f32 %v1001, %v1043
  %v1057 = vadd.f32 %v1002, %v1043
  %v1058 = vadd.f32 %v1003, %v1043
  %v1059 = vadd.f32 %v1004, %v1043
  %v1060 = vadd.f32 %v1005, %v1043
  %v1061 = vadd.f32 %v1006, %v1043
  %v1062 = vadd.f32 %v1007, %v1043
  %v1063 = vadd.f32 %v1008, %v1043
  %v1064 = vadd.f32 %v1009, %v1043
  %v1065 = vadd.f32 %v1010, %v1043
  %v1066 = vadd.f32 %v1011, %v1043
  %v1067 = vadd.f32 %v1012, %v1043
  %v1068 = vadd.f32 %v1013, %v1043
  %v1069 = vadd.f32 %v1014, %v1043
  %v1070 = vadd.f32 %v1015, %v1043
  %v1071 = vadd.f32 %v1016, %v1043
  %v1072 = vadd.f32 %v1017, %v1043
  %v1073 = vadd.f32 %v1018, %v1043
  %v1074 = vadd.f32 %v1019, %v1043
  %v1075 = vadd.f32 %v1020, %v1043
  %v1076 = vadd.f32 %v1021, %v1043
  %v1077 = vadd.f32 %v1022, %v1043
  %v1078 = vadd.f32 %v1023, %v1043
  %v1079 = vadd.f32 %v1024, %v1043
  %v1080 = vadd.f32 %v1025, %v1043
  %v1081 = vadd.f32 %v1026, %v1043
  %v1082 = vadd.f32 %v1027, %v1043
  %v1083 = vadd.f32 %v1028, %v1043
  %v1084 = vadd.f32 %v1029, %v1043
  %v1085 = vadd.f32 %v1030, %v1043
  %v1086 = vadd.f32 %v1031, %v1043
  %v1087 = vadd.f32 %v1032, %v1043
  %v1088 = vadd.f32 %v1033, %v1043
  %v1089 = vadd.f32 %v1034, %v1043
  %v1090 = vadd.f32 %v1035, %v1043
  %v1091 = vadd.f32 %v1036, %v1043
  %v1092 = vadd.f32 %v1037, %v1043
  %v1093 = vadd.f32 %v1038, %v1043
  %v1094 = vmax.f32 %v1045, 0.0
  %v1095 = vmax.f32 %v1046, 0.0
  %v1096 = vmax.f32 %v1047, 0.0
  %v1097 = vmax.f32 %v1048, 0.0
  %v1098 = vmax.f32 %v1049, 0.0
  %v1099 = vmax.f32 %v1050, 0.0
  %v1100 = vmax.f32 %v1051, 0.0
  %v1101 = vmax.f32 %v1052, 0.0
  %v1102 = vmax.f32 %v1053, 0.0
  %v1103 = vmax.f32 %v1054, 0.0
  %v1104 = vmax.f32 %v1055, 0.0
  %v1105 = vmax.f32 %v1056, 0.0
  %v1106 = vmax.f32 %v1057, 0.0
  %v1107 = vmax.f32 %v1058, 0.0
  %v1108 = vmax.f32 %v1059, 0.0
  %v1109 = vmax.f32 %v1060, 0.0
  %v1110 = vmax.f32 %v1061, 0.0
  %v1111 = vmax.f32 %v1062, 0.0
  %v1112 = vmax.f32 %v1063, 0.0
  %v1113 = vmax.f32 %v1064, 0.0
  %v1114 = vmax.f32 %v1065, 0.0
  %v1115 = vmax.f32 %v1066, 0.0
  %v1116 = vmax.f32 %v1067, 0.0
  %v1117 = vmax.f32 %v1068, 0.0
  %v1118 = vmax.f32 %v1069, 0.0
  %v1119 = vmax.f32 %v1070, 0.0
  %v1120 = vmax.f32 %v1071, 0.0
  %v1121 = vmax.f32 %v1072, 0.0
  %v1122 = vmax.f32 %v1073, 0.0
  %v1123 = vmax.f32 %v1074, 0.0
  %v1124 = vmax.f32 %v1075, 0.0
  %v1125 = vmax.f32 %v1076, 0.0
  %v1126 = vmax.f32 %v1077, 0.0
  %v1127 = vmax.f32 %v1078, 0.0
  %v1128 = vmax.f32 %v1079, 0.0
  %v1129 = vmax.f32 %v1080, 0.0
  %v1130 = vmax.f32 %v1081, 0.0
  %v1131 = vmax.f32 %v1082, 0.0
  %v1132 = vmax.f32 %v1083, 0.0
  %v1133 = vmax.f32 %v1084, 0.0
  %v1134 = vmax.f32 %v1085, 0.0
  %v1135 = vmax.f32 %v1086, 0.0
  %v1136 = vmax.f32 %v1087, 0.0
  %v1137 = vmax.f32 %v1088, 0.0
  %v1138 = vmax.f32 %v1089, 0.0
  %v1139 = vmax.f32 %v1090, 0.0
  %v1140 = vmax.f32 %v1091, 0.0
  %v1141 = vmax.f32 %v1092, 0.0
  %v1142 = vmax.f32 %v1093, 0.0
  %1143 = vst.msk [vmem:[%s4] sm:$0xff] %vm522, %v1094
  %1144 = vst.msk [vmem:[%s4 + $0x8] sm:$0xff] %vm522, %v1095
  %1145 = vst.msk [vmem:[%s4 + $0x10] sm:$0xff] %vm522, %v1096
  %1146 = vst.msk [vmem:[%s4 + $0x18] sm:$0xff] %vm522, %v1097
  %1147 = vst.msk [vmem:[%s4 + $0x20] sm:$0xff] %vm522, %v1098
  %1148 = vst.msk [vmem:[%s4 + $0x28] sm:$0xff] %vm522, %v1099
  %1149 = vst.msk [vmem:[%s4 + $0x30] sm:$0xff] %vm522, %v1100
  %1150 = vst.msk [vmem:[%s4 + $0x38] sm:$0xff] %vm522, %v1101
  %1151 = vst.msk [vmem:[%s4 + $0x40] sm:$0xff] %vm522, %v1102
  %1152 = vst.msk [vmem:[%s4 + $0x48] sm:$0xff] %vm522, %v1103
  %1153 = vst.msk [vmem:[%s4 + $0x50] sm:$0xff] %vm522, %v1104
  %1154 = vst.msk [vmem:[%s4 + $0x58] sm:$0xff] %vm522, %v1105
  %1155 = vst.msk [vmem:[%s4 + $0x60] sm:$0xff] %vm522, %v1106
  %1156 = vst.msk [vmem:[%s4 + $0x68] sm:$0xff] %vm522, %v1107
  %1157 = vst.msk [vmem:[%s4 + $0x70] sm:$0xff] %vm522, %v1108
  %1158 = vst.msk [vmem:[%s4 + $0x78] sm:$0xff] %vm522, %v1109
  %1159 = vst.msk [vmem:[%s4 + $0x80] sm:$0xff] %vm522, %v1110
  %1160 = vst.msk [vmem:[%s4 + $0x88] sm:$0xff] %vm522, %v1111
  %1161 = vst.msk [vmem:[%s4 + $0x90] sm:$0xff] %vm522, %v1112
  %1162 = vst.msk [vmem:[%s4 + $0x98] sm:$0xff] %vm522, %v1113
  %1163 = vst.msk [vmem:[%s4 + $0xa0] sm:$0xff] %vm522, %v1114
  %1164 = vst.msk [vmem:[%s4 + $0xa8] sm:$0xff] %vm522, %v1115
  %1165 = vst.msk [vmem:[%s4 + $0xb0] sm:$0xff] %vm522, %v1116
  %1166 = vst.msk [vmem:[%s4 + $0xb8] sm:$0xff] %vm522, %v1117
  %1167 = vst.msk [vmem:[%s4 + $0xc0] sm:$0xff] %vm522, %v1118
  %1168 = vst.msk [vmem:[%s4 + $0xc8] sm:$0xff] %vm522, %v1119
  %1169 = vst.msk [vmem:[%s4 + $0xd0] sm:$0xff] %vm522, %v1120
  %1170 = vst.msk [vmem:[%s4 + $0xd8] sm:$0xff] %vm522, %v1121
  %1171 = vst.msk [vmem:[%s4 + $0xe0] sm:$0xff] %vm522, %v1122
  %1172 = vst.msk [vmem:[%s4 + $0xe8] sm:$0xff] %vm522, %v1123
  %1173 = vst.msk [vmem:[%s4 + $0xf0] sm:$0xff] %vm522, %v1124
  %1174 = vst.msk [vmem:[%s4 + $0xf8] sm:$0xff] %vm522, %v1125
  %1175 = vst.msk [vmem:[%s4 + $0x100] sm:$0xff] %vm522, %v1126
  %1176 = vst.msk [vmem:[%s4 + $0x108] sm:$0xff] %vm522, %v1127
  %1177 = vst.msk [vmem:[%s4 + $0x110] sm:$0xff] %vm522, %v1128
  %1178 = vst.msk [vmem:[%s4 + $0x118] sm:$0xff] %vm522, %v1129
  %1179 = vst.msk [vmem:[%s4 + $0x120] sm:$0xff] %vm522, %v1130
  %1180 = vst.msk [vmem:[%s4 + $0x128] sm:$0xff] %vm522, %v1131
  %1181 = vst.msk [vmem:[%s4 + $0x130] sm:$0xff] %vm522, %v1132
  %1182 = vst.msk [vmem:[%s4 + $0x138] sm:$0xff] %vm522, %v1133
  %1183 = vst.msk [vmem:[%s4 + $0x140] sm:$0xff] %vm522, %v1134
  %1184 = vst.msk [vmem:[%s4 + $0x148] sm:$0xff] %vm522, %v1135
  %1185 = vst.msk [vmem:[%s4 + $0x150] sm:$0xff] %vm522, %v1136
  %1186 = vst.msk [vmem:[%s4 + $0x158] sm:$0xff] %vm522, %v1137
  %1187 = vst.msk [vmem:[%s4 + $0x160] sm:$0xff] %vm522, %v1138
  %1188 = vst.msk [vmem:[%s4 + $0x168] sm:$0xff] %vm522, %v1139
  %1189 = vst.msk [vmem:[%s4 + $0x170] sm:$0xff] %vm522, %v1140
  %1190 = vst.msk [vmem:[%s4 + $0x178] sm:$0xff] %vm522, %v1141
  %1191 = vst.msk [vmem:[%s4 + $0x180] sm:$0xff] %vm522, %v1142
  // Predicated region
  $region18: #{conv2d_bn_relu.1} parent=0 // pred_check
    _
  $region19: #{conv2d_bn_relu.1} parent=0 // pred_check_branch
    %1193 = sbr.rel (0) target = $region21
  $region20: #{conv2d_bn_relu.1} parent=0 // pred_region
    _
  $region21: #{conv2d_bn_relu.1} parent=0 // pred_fallthru
    _
  // Predicated region
  $region22: #{conv2d_bn_relu.1} parent=0 // pred_check
    _
  $region23: #{conv2d_bn_relu.1} parent=0 // pred_check_branch
    %1195 = sbr.rel (0) target = $region25
  $region24: #{conv2d_bn_relu.1} parent=0 // pred_region
    _
  $region25: #{conv2d_bn_relu.1} parent=0 // pred_fallthru
    _

</llo_original>
